<compile_context>
chip_gen: v6e
topology: v6e:2x2x1
jax: 0.10.0
libtpu: 0.0.40
codegen_flags: <defaults>
</compile_context>

<pallas_src>
import jax
import jax.numpy as jnp
from jax import lax
from jax.experimental import pallas as pl
from jax.experimental.pallas import tpu as pltpu

NOUNS_SIZE = 8       # opts.nouns_size   (sublane-friendly)
MEMORY_SIZE = 128    # opts.memory_size  (lane-dense: multiple of 128)
N_UPDATES = 10       # number of forward() calls folded into one batched kernel


def fused_memory_kernel(idx_ref, att_ref, mem_in_ref, cnt_in_ref,
                        mem_out_ref, cnt_out_ref, fin_out_ref):
    """Batched scatter-add into the noun memory, counter bump, fused finish().

    idx_ref     : VMEM (1, N_UPDATES) int32       -- noun index per update (-1 = skip)
    att_ref     : VMEM (N_UPDATES, MEMORY_SIZE) f32
    mem_in/out  : VMEM (NOUNS_SIZE, MEMORY_SIZE) f32   (aliased in/out)
    cnt_in/out  : VMEM (NOUNS_SIZE, MEMORY_SIZE) f32, lane-replicated (aliased in/out)
    fin_out     : VMEM (NOUNS_SIZE, MEMORY_SIZE) f32 = mem / cnt   (finish())
    """
    # One-hot (NOUNS, N_UP): entry (n, k) == 1 iff idx[k] == n.
    # idx == -1 -> all-zero column, so out-of-vocabulary updates are skipped,
    # matching the `if index > -1` guard in the reference.
    oh = (lax.broadcasted_iota(jnp.int32, (NOUNS_SIZE, N_UPDATES), 0)
          == idx_ref[...]).astype(jnp.float32)                      # (NOUNS, N_UP)

    # Scatter-add as a single MXU matmul (replaces the serial per-call update).
    mem_new = mem_in_ref[...] + jnp.dot(oh, att_ref[...],
                                        preferred_element_type=jnp.float32)

    # Counter bump, lane-replicated: oh @ ones gives row n = (#updates hitting n)
    # broadcast across all MEMORY_SIZE lanes.  0/1 sums of small ints -> exact in f32.
    cnt_new = cnt_in_ref[...] + jnp.dot(
        oh, jnp.ones((N_UPDATES, MEMORY_SIZE), jnp.float32),
        preferred_element_type=jnp.float32)

    mem_out_ref[...] = mem_new
    cnt_out_ref[...] = cnt_new

    # Fused finish(): plain element-wise divide; 0/0 -> nan exactly like numpy.
    fin_out_ref[...] = mem_new / cnt_new


@jax.jit
def base_memory_update(idx_row, att_batch, nouns_memory, nouns_counter):
    """One fused pallas_call: scatter-add a batch of att_res rows into the noun
    memory table, bump the counters, and emit the normalized table (finish())."""
    return pl.pallas_call(
        fused_memory_kernel,
        out_shape=(
            jax.ShapeDtypeStruct((NOUNS_SIZE, MEMORY_SIZE), jnp.float32),  # memory
            jax.ShapeDtypeStruct((NOUNS_SIZE, MEMORY_SIZE), jnp.float32),  # counter (lane-replicated)
            jax.ShapeDtypeStruct((NOUNS_SIZE, MEMORY_SIZE), jnp.float32),  # finished
        ),
        in_specs=[
            pl.BlockSpec(memory_space=pltpu.MemorySpace.VMEM),   # idx_row (1, N_UP)
            pl.BlockSpec(memory_space=pltpu.MemorySpace.VMEM),   # att_batch
            pl.BlockSpec(memory_space=pltpu.MemorySpace.VMEM),   # nouns_memory
            pl.BlockSpec(memory_space=pltpu.MemorySpace.VMEM),   # nouns_counter
        ],
        out_specs=(
            pl.BlockSpec(memory_space=pltpu.MemorySpace.VMEM),
            pl.BlockSpec(memory_space=pltpu.MemorySpace.VMEM),
            pl.BlockSpec(memory_space=pltpu.MemorySpace.VMEM),
        ),
        # In-place read-modify-write of the state tables.
        input_output_aliases={2: 0, 3: 1},
    )(idx_row, att_batch, nouns_memory, nouns_counter)


if __name__ == "__main__":
    # ----- host-side "dictionary" glue, mirroring opts.vocabulary / opts.nouns -----
    vocabulary = {f"w{i}": f"noun{i % NOUNS_SIZE}" for i in range(12)}  # word -> noun string
    nouns = {f"noun{i}": i for i in range(NOUNS_SIZE)}                  # noun string -> row index

    # A sequence of forward() calls: one word is out-of-vocab -> index -1 (skipped).
    words = ["w0", "w1", "w2", "w3", "OOV_WORD", "w4", "w5", "w6", "w7", "w10"]
    assert len(words) == N_UPDATES
    indices_host = [nouns.get(vocabulary.get(w, "NULL"), -1) for w in words]
    idx_row = jnp.asarray(indices_host, dtype=jnp.int32).reshape(1, N_UPDATES)

    # ----- deterministic inputs / state -----
    key = jax.random.PRNGKey(0)
    att_batch = jax.random.normal(key, (N_UPDATES, MEMORY_SIZE), dtype=jnp.float32)
    nouns_memory = jnp.zeros((NOUNS_SIZE, MEMORY_SIZE), dtype=jnp.float32)
    nouns_counter = jnp.zeros((NOUNS_SIZE, MEMORY_SIZE), dtype=jnp.float32)  # lane-replicated

    # ----- run the fused kernel once (accumulate batch + finish) -----
    mem_out, cnt_out, finished = base_memory_update(
        idx_row, att_batch, nouns_memory, nouns_counter)
    jax.block_until_ready((mem_out, cnt_out, finished))

    # ----- pure-JAX reference -----
    ref_mem = jnp.zeros((NOUNS_SIZE, MEMORY_SIZE), dtype=jnp.float32)
    ref_cnt = jnp.zeros((NOUNS_SIZE,), dtype=jnp.float32)
    for i, idx in enumerate(indices_host):
        if idx > -1:
            ref_mem = ref_mem.at[idx].add(att_batch[i])
            ref_cnt = ref_cnt.at[idx].add(1.0)
    ref_fin = ref_mem / ref_cnt[:, None]

    assert jnp.allclose(mem_out, ref_mem, atol=1e-5, rtol=1e-5)
    assert jnp.array_equal(cnt_out[:, 0], ref_cnt)                 # scalar counters
    assert jnp.array_equal(cnt_out, cnt_out[:, :1] * jnp.ones_like(cnt_out))  # lanes identical
    assert jnp.allclose(finished, ref_fin, atol=1e-5, rtol=1e-5, equal_nan=True)

    print("KERNEL_OK")
</pallas_src>

<mosaic_0001>
module attributes {stable_mosaic.version = 11 : i64} {
  func.func @fused_memory_kernel(%arg0: memref<1x10xi32, #tpu.memory_space<vmem>>, %arg1: memref<10x128xf32, #tpu.memory_space<vmem>>, %arg2: memref<8x128xf32, #tpu.memory_space<vmem>>, %arg3: memref<8x128xf32, #tpu.memory_space<vmem>>, %arg4: memref<8x128xf32, #tpu.memory_space<vmem>>, %arg5: memref<8x128xf32, #tpu.memory_space<vmem>>, %arg6: memref<8x128xf32, #tpu.memory_space<vmem>>) attributes {dimension_semantics = [], scalar_prefetch = 0 : i64, scratch_operands = 0 : i64, tpu.core_type = #tpu.core_type<tc>} {
    %0 = tpu.iota {dimensions = array<i32: 0>} : vector<8x10xi32>
    %c0 = arith.constant 0 : index
    %c0_0 = arith.constant 0 : index
    %1 = vector.load %arg0[%c0, %c0_0] : memref<1x10xi32, #tpu.memory_space<vmem>>, vector<1x10xi32>
    %2 = vector.broadcast %1 : vector<1x10xi32> to vector<8x10xi32>
    %3 = arith.cmpi eq, %0, %2 : vector<8x10xi32>
    %4 = arith.extui %3 : vector<8x10xi1> to vector<8x10xi32>
    %5 = arith.sitofp %4 : vector<8x10xi32> to vector<8x10xf32>
    %c0_1 = arith.constant 0 : index
    %c0_2 = arith.constant 0 : index
    %6 = vector.load %arg2[%c0_1, %c0_2] : memref<8x128xf32, #tpu.memory_space<vmem>>, vector<8x128xf32>
    %c0_3 = arith.constant 0 : index
    %c0_4 = arith.constant 0 : index
    %7 = vector.load %arg1[%c0_3, %c0_4] : memref<10x128xf32, #tpu.memory_space<vmem>>, vector<10x128xf32>
    %cst = arith.constant dense<0.000000e+00> : vector<8x128xf32>
    %8 = tpu.matmul %5, %7, %cst {dimension_numbers = #tpu.dot_dimension_numbers<[1], [0], [0], [1], [0, 0, 1, 1], [], []>} : vector<8x10xf32>, vector<10x128xf32>, vector<8x128xf32> -> vector<8x128xf32>
    %9 = arith.addf %6, %8 : vector<8x128xf32>
    %c0_5 = arith.constant 0 : index
    %c0_6 = arith.constant 0 : index
    %10 = vector.load %arg3[%c0_5, %c0_6] : memref<8x128xf32, #tpu.memory_space<vmem>>, vector<8x128xf32>
    %cst_7 = arith.constant 1.000000e+00 : f32
    %11 = vector.broadcast %cst_7 : f32 to vector<10x128xf32>
    %cst_8 = arith.constant dense<0.000000e+00> : vector<8x128xf32>
    %12 = tpu.matmul %5, %11, %cst_8 {dimension_numbers = #tpu.dot_dimension_numbers<[1], [0], [0], [1], [0, 0, 1, 1], [], []>} : vector<8x10xf32>, vector<10x128xf32>, vector<8x128xf32> -> vector<8x128xf32>
    %13 = arith.addf %10, %12 : vector<8x128xf32>
    %c0_9 = arith.constant 0 : index
    %c0_10 = arith.constant 0 : index
    %14 = vector.load %arg4[%c0_9, %c0_10] : memref<8x128xf32, #tpu.memory_space<vmem>>, vector<8x128xf32>
    tpu.vector_store %arg4[%c0_9, %c0_10], %9 {strides = array<i32>} : memref<8x128xf32, #tpu.memory_space<vmem>>, vector<8x128xf32>,
    %c0_11 = arith.constant 0 : index
    %c0_12 = arith.constant 0 : index
    %15 = vector.load %arg5[%c0_11, %c0_12] : memref<8x128xf32, #tpu.memory_space<vmem>>, vector<8x128xf32>
    tpu.vector_store %arg5[%c0_11, %c0_12], %13 {strides = array<i32>} : memref<8x128xf32, #tpu.memory_space<vmem>>, vector<8x128xf32>,
    %16 = arith.divf %9, %13 : vector<8x128xf32>
    %c0_13 = arith.constant 0 : index
    %c0_14 = arith.constant 0 : index
    %17 = vector.load %arg6[%c0_13, %c0_14] : memref<8x128xf32, #tpu.memory_space<vmem>>, vector<8x128xf32>
    tpu.vector_store %arg6[%c0_13, %c0_14], %16 {strides = array<i32>} : memref<8x128xf32, #tpu.memory_space<vmem>>, vector<8x128xf32>,
    return
  }
}

</mosaic_0001>

<llo_original>
// kernel: base_memory_update.1
$region0: #{base_memory_update.1}
  #allocation0 [shape = 'u32[]', space=smem, size = 0x4, offset = 0x4, fixed_abs, tag = 'smem constant byte address 0x4 - core index']
  #allocation1 [shape = 'u32[144,128]{1,0:T(1,128)}', space=vmem, size = 0x12000, scoped, tag = 'internal scratch']
  %s0 = inlined_call_operand.vmem [shape: s32[1,10], index: 0, kind: input, shape index: {}]
  %s1 = inlined_call_operand.vmem [shape: f32[10,128], index: 1, kind: input, shape index: {}]
  %s2 = inlined_call_operand.hbm [shape: f32[8,128], index: 2, kind: input, shape index: {}, may-alias: {2,4}]
  %s3 = inlined_call_operand.hbm [shape: f32[8,128], index: 3, kind: input, shape index: {}, may-alias: {3,5}]
  %s4 = inlined_call_operand.hbm [shape: f32[8,128], index: 4, kind: output, shape index: {0}, may-alias: {2,4}]
  %s5 = inlined_call_operand.hbm [shape: f32[8,128], index: 5, kind: output, shape index: {1}, may-alias: {3,5}]
  %s6 = inlined_call_operand.hbm [shape: f32[8,128], index: 6, kind: output, shape index: {2}]
  %7 = xla_tuple %s4, %s5, %s6
  %s8 = sld [smem:[#allocation0]]
  $region50: #{base_memory_update.1} parent=0
    _
  %s10 = ssub.s32 1, %s8
  %s11 = scalar_select 0, %s10, %s8
  $region1: #{base_memory_update.1} parent=0
    #allocation2 [shape = 'u8[4096]{0}', space=vmem, size = 0x1000, scoped, tag = 'input window, operand 2, single buffered']
    #allocation3 [shape = 's32[1]{0}', space=sflag, size = 0x4, scoped, tag = 'scoped memory for base_memory_update.1']
    #allocation4 [shape = 's32[1]{0}', space=sflag, size = 0x4, scoped, tag = 'scoped memory for base_memory_update.1']
    #allocation5 [shape = 'u8[4096]{0}', space=vmem, size = 0x1000, scoped, tag = 'input window, operand 3, single buffered']
    #allocation6 [shape = 's32[1]{0}', space=sflag, size = 0x4, scoped, tag = 'scoped memory for base_memory_update.1']
    #allocation7 [shape = 'u8[4096]{0}', space=vmem, size = 0x1000, scoped, tag = 'output window, operand 0, single buffered']
    #allocation8 [shape = 'u8[4096]{0}', space=vmem, size = 0x1000, scoped, tag = 'output window, operand 1, single buffered']
    #allocation9 [shape = 's32[1]{0}', space=sflag, size = 0x4, scoped, tag = 'scoped memory for base_memory_update.1']
    #allocation10 [shape = 'u8[4096]{0}', space=vmem, size = 0x1000, scoped, tag = 'output window, operand 2, single buffered']
    %12 = vsyncpa [#allocation3], 0
    %13 = vsyncpa [#allocation6], 0
    %14 = vsyncpa [#allocation4], 0
    %15 = vsyncpa [#allocation9], 0
    // Predicated region
    $region2: #{base_memory_update.1} parent=1 // pred_check
      _
    $region3: #{base_memory_update.1} parent=1 // pred_check_branch
      %17 = sbr.rel (0) target = $region5
    $region4: #{base_memory_update.1} parent=1 // pred_region
      _
    $region5: #{base_memory_update.1} parent=1 // pred_fallthru
      _
    // Predicated region
    $region6: #{base_memory_update.1} parent=1 // pred_check
      _
    $region7: #{base_memory_update.1} parent=1 // pred_check_branch
      %19 = sbr.rel (0) target = $region9
    $region8: #{base_memory_update.1} parent=1 // pred_region
      _
    $region9: #{base_memory_update.1} parent=1 // pred_fallthru
      _
    // Predicated region
    $region10: #{base_memory_update.1} parent=1 // pred_check
      _
    $region11: #{base_memory_update.1} parent=1 // pred_check_branch
      %21 = sbr.rel (0) target = $region13
    $region12: #{base_memory_update.1} parent=1 // pred_region
      %s23 = ssub.s32 128, 128
      %24 = vsyncadd [#allocation3], %s23
      %s26 = sshll.u32 [#allocation2], 4
      %s27 = int_to_ptr.vmem [resolvable:$true] %s26
      %29 = dma.hbm_to_vmem [thread:$0]  %s2, 128, %s27, [#allocation3]
    $region13: #{base_memory_update.1} parent=1 // pred_fallthru
      _
    // Predicated region
    $region14: #{base_memory_update.1} parent=1 // pred_check
      _
    $region15: #{base_memory_update.1} parent=1 // pred_check_branch
      %31 = sbr.rel (0) target = $region17
    $region16: #{base_memory_update.1} parent=1 // pred_region
      %s33 = ssub.s32 128, 128
      %34 = vsyncadd [#allocation6], %s33
      %s36 = sshll.u32 [#allocation5], 4
      %s37 = int_to_ptr.vmem [resolvable:$true] %s36
      %39 = dma.hbm_to_vmem [thread:$0]  %s3, 128, %s37, [#allocation6]
    $region17: #{base_memory_update.1} parent=1 // pred_fallthru
      _
    // Predicated region
    $region18: #{base_memory_update.1} parent=1 // pred_check
      _
    $region19: #{base_memory_update.1} parent=1 // pred_check_branch
      %41 = sbr.rel (0) target = $region21
    $region20: #{base_memory_update.1} parent=1 // pred_region
      %42 = dma.done [#allocation3], 128
    $region21: #{base_memory_update.1} parent=1 // pred_fallthru
      _
    // Predicated region
    $region22: #{base_memory_update.1} parent=1 // pred_check
      _
    $region23: #{base_memory_update.1} parent=1 // pred_check_branch
      %44 = sbr.rel (0) target = $region25
    $region24: #{base_memory_update.1} parent=1 // pred_region
      %45 = dma.done [#allocation6], 128
    $region25: #{base_memory_update.1} parent=1 // pred_fallthru
      _
    %v46 = vlaneseq
    %v47 = vshrl.u32 %v46, 7
    %v48 = vld [vmem:[%s0] sm:$0x1]
    %v49 = vlaneseq
    %v50 = vshrl.u32 %v49, 7
    %v51 = vsub.s32 0, %v50
    %v52 = vrot.slane %v48, %v51
    %vm53 = vcmp.eq.s32.totalorder %v47, %v52
    %v54 = vsel %vm53, 1, 0
    %v55 = vcvt.s32.f32 %v54
    %v56 = vld [vmem:[#allocation2] sm:$0xff]
    %v57 = vld [vmem:[%s1] sm:$0xff]
    %v58 = vld [vmem:[%s1 + $0x8] sm:$0x3]
    %vm59 = vcmask 80896
    %v61 = vsel %vm59, %v55, 0
    %vm63 = vcmask 1041408
    %v65 = vsel %vm63, %v58, 0
    %67 = vmatprep.subr.mxu0 0.0
    %68 = vmatpush1.msra.mxu0 0.0
    %69 = vmatprep.subr.mxu0 0.0
    %70 = vmatpush1.msra.mxu0 0.0
    %71 = vmatprep.subr.mxu0 0.0
    %72 = vmatpush1.msra.mxu0 0.0
    %73 = vmatprep.subr.mxu0 0.0
    %74 = vmatpush1.msra.mxu0 0.0
    %75 = vmatprep.subr.mxu0 0.0
    %76 = vmatpush1.msra.mxu0 0.0
    %77 = vmatprep.subr.mxu0 0.0
    %78 = vmatpush1.msra.mxu0 0.0
    %79 = vmatprep.subr.mxu0 0.0
    %80 = vmatpush1.msra.mxu0 0.0
    %81 = vmatprep.subr.mxu0 0.0
    %82 = vmatpush1.msra.mxu0 0.0
    %83 = vmatprep.subr.mxu0 0.0
    %84 = vmatpush1.msra.mxu0 0.0
    %85 = vmatprep.subr.mxu0 0.0
    %86 = vmatpush1.msra.mxu0 0.0
    %87 = vmatprep.subr.mxu0 0.0
    %88 = vmatpush1.msra.mxu0 0.0
    %89 = vmatprep.subr.mxu0 0.0
    %90 = vmatpush1.msra.mxu0 0.0
    %91 = vmatprep.subr.mxu0 0.0
    %92 = vmatpush1.msra.mxu0 0.0
    %93 = vmatprep.subr.mxu0 0.0
    %94 = vmatpush1.msra.mxu0 0.0
    %95 = vmatprep.subr.mxu0 0.0
    %96 = vmatpush1.msra.mxu0 %v65
    %97 = vmatprep.subr.mxu0 0.0
    %98 = vmatpush1.msra.mxu0 %v57
    %99 = vmatprep.subr.mxu0 0.0
    %100 = vmatpush2.msra.mxu0 0.0
    %101 = vmatprep.subr.mxu0 0.0
    %102 = vmatpush2.msra.mxu0 0.0
    %103 = vmatprep.subr.mxu0 0.0
    %104 = vmatpush2.msra.mxu0 0.0
    %105 = vmatprep.subr.mxu0 0.0
    %106 = vmatpush2.msra.mxu0 0.0
    %107 = vmatprep.subr.mxu0 0.0
    %108 = vmatpush2.msra.mxu0 0.0
    %109 = vmatprep.subr.mxu0 0.0
    %110 = vmatpush2.msra.mxu0 0.0
    %111 = vmatprep.subr.mxu0 0.0
    %112 = vmatpush2.msra.mxu0 0.0
    %113 = vmatprep.subr.mxu0 0.0
    %114 = vmatpush2.msra.mxu0 0.0
    %115 = vmatprep.subr.mxu0 0.0
    %116 = vmatpush2.msra.mxu0 0.0
    %117 = vmatprep.subr.mxu0 0.0
    %118 = vmatpush2.msra.mxu0 0.0
    %119 = vmatprep.subr.mxu0 0.0
    %120 = vmatpush2.msra.mxu0 0.0
    %121 = vmatprep.subr.mxu0 0.0
    %122 = vmatpush2.msra.mxu0 0.0
    %123 = vmatprep.subr.mxu0 0.0
    %124 = vmatpush2.msra.mxu0 0.0
    %125 = vmatprep.subr.mxu0 0.0
    %126 = vmatpush2.msra.mxu0 0.0
    %127 = vmatprep.subr.mxu0 0.0
    %128 = vmatpush2.msra.mxu0 0.0
    %129 = vmatprep.subr.mxu0 0.0
    %130 = vmatpush2.msra.mxu0 0.0
    %131 = vmatprep.mubr.f32.mxu0 0.0
    %132 = vmatmul.mubr.f32.gmra.mxu0 %v61
    %v133 = vpop.f32.mrf.mxu0
    %v134 = vadd.f32 0.0, %v133
    %v135 = vpop.f32.mrf.mxu0
    %136 = vdwg.mxu0
    %v137 = vadd.f32 %v56, %v134
    %v138 = vld [vmem:[#allocation5] sm:$0xff]
    %v140 = vsel %vm63, 1.0, 0
    %142 = vmatprep.subr.mxu0 0.0
    %143 = vmatpush1.msra.mxu0 0.0
    %144 = vmatprep.subr.mxu0 0.0
    %145 = vmatpush1.msra.mxu0 0.0
    %146 = vmatprep.subr.mxu0 0.0
    %147 = vmatpush1.msra.mxu0 0.0
    %148 = vmatprep.subr.mxu0 0.0
    %149 = vmatpush1.msra.mxu0 0.0
    %150 = vmatprep.subr.mxu0 0.0
    %151 = vmatpush1.msra.mxu0 0.0
    %152 = vmatprep.subr.mxu0 0.0
    %153 = vmatpush1.msra.mxu0 0.0
    %154 = vmatprep.subr.mxu0 0.0
    %155 = vmatpush1.msra.mxu0 0.0
    %156 = vmatprep.subr.mxu0 0.0
    %157 = vmatpush1.msra.mxu0 0.0
    %158 = vmatprep.subr.mxu0 0.0
    %159 = vmatpush1.msra.mxu0 0.0
    %160 = vmatprep.subr.mxu0 0.0
    %161 = vmatpush1.msra.mxu0 0.0
    %162 = vmatprep.subr.mxu0 0.0
    %163 = vmatpush1.msra.mxu0 0.0
    %164 = vmatprep.subr.mxu0 0.0
    %165 = vmatpush1.msra.mxu0 0.0
    %166 = vmatprep.subr.mxu0 0.0
    %167 = vmatpush1.msra.mxu0 0.0
    %168 = vmatprep.subr.mxu0 0.0
    %169 = vmatpush1.msra.mxu0 0.0
    %170 = vmatprep.subr.mxu0 0.0
    %171 = vmatpush1.msra.mxu0 %v140
    %172 = vmatprep.subr.mxu0 0.0
    %173 = vmatpush1.msra.mxu0 1.0
    %174 = vmatprep.subr.mxu0 0.0
    %175 = vmatpush2.msra.mxu0 0.0
    %176 = vmatprep.subr.mxu0 0.0
    %177 = vmatpush2.msra.mxu0 0.0
    %178 = vmatprep.subr.mxu0 0.0
    %179 = vmatpush2.msra.mxu0 0.0
    %180 = vmatprep.subr.mxu0 0.0
    %181 = vmatpush2.msra.mxu0 0.0
    %182 = vmatprep.subr.mxu0 0.0
    %183 = vmatpush2.msra.mxu0 0.0
    %184 = vmatprep.subr.mxu0 0.0
    %185 = vmatpush2.msra.mxu0 0.0
    %186 = vmatprep.subr.mxu0 0.0
    %187 = vmatpush2.msra.mxu0 0.0
    %188 = vmatprep.subr.mxu0 0.0
    %189 = vmatpush2.msra.mxu0 0.0
    %190 = vmatprep.subr.mxu0 0.0
    %191 = vmatpush2.msra.mxu0 0.0
    %192 = vmatprep.subr.mxu0 0.0
    %193 = vmatpush2.msra.mxu0 0.0
    %194 = vmatprep.subr.mxu0 0.0
    %195 = vmatpush2.msra.mxu0 0.0
    %196 = vmatprep.subr.mxu0 0.0
    %197 = vmatpush2.msra.mxu0 0.0
    %198 = vmatprep.subr.mxu0 0.0
    %199 = vmatpush2.msra.mxu0 0.0
    %200 = vmatprep.subr.mxu0 0.0
    %201 = vmatpush2.msra.mxu0 0.0
    %202 = vmatprep.subr.mxu0 0.0
    %203 = vmatpush2.msra.mxu0 0.0
    %204 = vmatprep.subr.mxu0 0.0
    %205 = vmatpush2.msra.mxu0 0.0
    %206 = vmatprep.mubr.f32.mxu0 0.0
    %207 = vmatmul.mubr.f32.gmra.mxu0 %v61
    %v208 = vpop.f32.mrf.mxu0
    %v209 = vadd.f32 0.0, %v208
    %v210 = vpop.f32.mrf.mxu0
    %211 = vdwg.mxu0
    %v212 = vadd.f32 %v138, %v209
    %213 = vst [vmem:[#allocation7] sm:$0xff] %v137
    %214 = vst [vmem:[#allocation8] sm:$0xff] %v212
    %v215 = vrcp.pop %v212
    %v216 = vmul.f32 %v137, %v215
    %217 = vst [vmem:[#allocation10] sm:$0xff] %v216
    // Predicated region
    $region26: #{base_memory_update.1} parent=1 // pred_check
      _
    $region27: #{base_memory_update.1} parent=1 // pred_check_branch
      %219 = sbr.rel (0) target = $region29
    $region28: #{base_memory_update.1} parent=1 // pred_region
      %s221 = ssub.s32 128, 128
      %222 = vsyncadd [#allocation4], %s221
      %s224 = sshll.u32 [#allocation7], 4
      %s225 = int_to_ptr.vmem [resolvable:$true] %s224
      %227 = dma.vmem_to_hbm [thread:$0]  %s225, 128, %s4, [#allocation4]
    $region29: #{base_memory_update.1} parent=1 // pred_fallthru
      _
    // Predicated region
    $region30: #{base_memory_update.1} parent=1 // pred_check
      _
    $region31: #{base_memory_update.1} parent=1 // pred_check_branch
      %229 = sbr.rel (0) target = $region33
    $region32: #{base_memory_update.1} parent=1 // pred_region
      %s231 = ssub.s32 128, 128
      %232 = vsyncadd [#allocation9], %s231
      %s234 = sshll.u32 [#allocation8], 4
      %s235 = int_to_ptr.vmem [resolvable:$true] %s234
      %237 = dma.vmem_to_hbm [thread:$0]  %s235, 128, %s5, [#allocation9]
    $region33: #{base_memory_update.1} parent=1 // pred_fallthru
      _
    // Predicated region
    $region34: #{base_memory_update.1} parent=1 // pred_check
      _
    $region35: #{base_memory_update.1} parent=1 // pred_check_branch
      %239 = sbr.rel (0) target = $region37
    $region36: #{base_memory_update.1} parent=1 // pred_region
      %s241 = ssub.s32 128, 128
      %242 = vsyncadd [#allocation9], %s241
      %s244 = sshll.u32 [#allocation10], 4
      %s245 = int_to_ptr.vmem [resolvable:$true] %s244
      %247 = dma.vmem_to_hbm [thread:$0]  %s245, 128, %s6, [#allocation9]
    $region37: #{base_memory_update.1} parent=1 // pred_fallthru
      _
    // Predicated region
    $region38: #{base_memory_update.1} parent=1 // pred_check
      _
    $region39: #{base_memory_update.1} parent=1 // pred_check_branch
      %249 = sbr.rel (0) target = $region41
    $region40: #{base_memory_update.1} parent=1 // pred_region
      %250 = dma.done [#allocation4], 128
    $region41: #{base_memory_update.1} parent=1 // pred_fallthru
      _
    // Predicated region
    $region42: #{base_memory_update.1} parent=1 // pred_check
      _
    $region43: #{base_memory_update.1} parent=1 // pred_check_branch
      %252 = sbr.rel (0) target = $region45
    $region44: #{base_memory_update.1} parent=1 // pred_region
      %253 = dma.done [#allocation9], 128
    $region45: #{base_memory_update.1} parent=1 // pred_fallthru
      _
    // Predicated region
    $region46: #{base_memory_update.1} parent=1 // pred_check
      _
    $region47: #{base_memory_update.1} parent=1 // pred_check_branch
      %255 = sbr.rel (0) target = $region49
    $region48: #{base_memory_update.1} parent=1 // pred_region
      %256 = dma.done [#allocation9], 128
    $region49: #{base_memory_update.1} parent=1 // pred_fallthru
      _
    %257 = vsyncpa [#allocation3], 1
    %258 = vsyncpa [#allocation6], 1
    %259 = vsyncpa [#allocation4], 1
    %260 = vsyncpa [#allocation9], 1

</llo_original>
